<compile_context>
chip_gen: v7x
topology: tpu7x:2x2x1
jax: 0.10.0
libtpu: 0.0.40
codegen_flags: <defaults>
</compile_context>

<pallas_src>
import functools

import jax
import jax.numpy as jnp
from jax.experimental import pallas as pl
from jax.experimental.pallas import tpu as pltpu


def _round_up(a, b):
    return (a + b - 1) // b * b


# ---------------------------------------------------------------------------
# Kernel
# ---------------------------------------------------------------------------
def autoencoder_kernel(x_ref, we1_ref, be1_ref, we2_ref, be2_ref,
                       wd1_ref, bd1_ref, wd2_ref, bd2_ref,
                       dec_ref, dy_ref, *, input_dim, hidden_dim, chunk_rows):
    D, H = input_dim, hidden_dim
    tile_rows = x_ref.shape[1]
    n_chunks = tile_rows // chunk_rows

    # ---- hoist the tiny weights out of the loop as SMEM scalar reads ----
    def read_mat(w_ref, b_ref, out_dim, in_dim):
        w = [[w_ref[o * in_dim + i] for i in range(in_dim)]
             for o in range(out_dim)]
        b = [b_ref[o] for o in range(out_dim)]
        return w, b

    w_e1, b_e1 = read_mat(we1_ref, be1_ref, H, D)
    w_e2, b_e2 = read_mat(we2_ref, be2_ref, D, H)
    w_d1, b_d1 = read_mat(wd1_ref, bd1_ref, H, D)
    w_d2, b_d2 = read_mat(wd2_ref, bd2_ref, D, H)

    def linear(w, b, planes, relu=False):
        """y_o = sum_i w[o][i] * plane_i + b[o]  (scalar * plane VPU MACs)."""
        outs = []
        for wo, bo in zip(w, b):
            acc = planes[0] * wo[0]
            for i in range(1, len(planes)):
                acc = acc + planes[i] * wo[i]
            acc = acc + bo
            if relu:
                acc = jnp.maximum(acc, 0.0)
            outs.append(acc)
        return outs

    def softmax(planes):
        """Softmax across the (static) list of feature planes."""
        m = planes[0]
        for p in planes[1:]:
            m = jnp.maximum(m, p)
        es = [jnp.exp(p - m) for p in planes]
        s = es[0]
        for e in es[1:]:
            s = s + e
        inv = pl.reciprocal(s, approx=True)
        return [e * inv for e in es]

    def body(c, carry):
        r = pl.multiple_of(c * chunk_rows, chunk_rows)
        xs = [x_ref[d, pl.ds(r, chunk_rows), :] for d in range(D)]

        # encoder: Linear(D,H) -> ReLU -> Linear(H,D) -> softmax -> sharpen(T=1)
        h = linear(w_e1, b_e1, xs, relu=True)
        z = linear(w_e2, b_e2, h)
        p = softmax(z)
        s = p[0]
        for q in p[1:]:
            s = s + q
        inv = pl.reciprocal(s, approx=True)          # sharpen: p / sum(p)
        dy = [q * inv for q in p]
        for d in range(D):
            dy_ref[d, pl.ds(r, chunk_rows), :] = dy[d]

        # decoder: Linear(D,H) -> ReLU -> Linear(H,D) -> softmax
        h2 = linear(w_d1, b_d1, dy, relu=True)
        z2 = linear(w_d2, b_d2, h2)
        dec = softmax(z2)
        for d in range(D):
            dec_ref[d, pl.ds(r, chunk_rows), :] = dec[d]
        return carry

    jax.lax.fori_loop(0, n_chunks, body, 0, unroll=True)


# ---------------------------------------------------------------------------
# Wrapper
# ---------------------------------------------------------------------------
@functools.partial(jax.jit, static_argnames=("input_dim",))
def autoencoder_forward(x, params, *, input_dim):
    """Returns (decoder(d_y), d_y), matching the PyTorch forward."""
    we1, be1, we2, be2, wd1, bd1, wd2, bd2 = params
    x2d = x.reshape(-1, input_dim).astype(jnp.float32)   # x.view(-1, d)
    N, D = x2d.shape
    H = we1.shape[0]

    # Batch on the 128-lane axis: one dense (rows, 128) plane per feature.
    rows = -(-N // 128)
    TARGET_TILE_ROWS = 128            # 16384 batch elements per grid step
    if rows >= 16:
        # multiple of 8 (layout rule for partial blocks), aim for >= 2 tiles
        tile_rows = min(TARGET_TILE_ROWS, _round_up(-(-rows // 2), 8))
    else:
        tile_rows = rows              # single full-extent block
    rows_pad = _round_up(rows, tile_rows)
    num_tiles = rows_pad // tile_rows
    n_pad = rows_pad * 128
    chunk_rows = 8 if tile_rows % 8 == 0 else tile_rows

    # TODO(synk): the pad/transpose relayouts below are extra HBM passes; drop
    # them if downstream code can consume the (D, rows, 128) plane layout.
    x_planes = jnp.pad(x2d.T, ((0, 0), (0, n_pad - N))).reshape(D, rows_pad, 128)

    stream = pl.BlockSpec((D, tile_rows, 128), lambda i: (0, i, 0))
    smem = pl.BlockSpec(memory_space=pltpu.MemorySpace.SMEM)

    out_shape = (
        jax.ShapeDtypeStruct((D, rows_pad, 128), jnp.float32),  # decoder out
        jax.ShapeDtypeStruct((D, rows_pad, 128), jnp.float32),  # d_y
    )

    kernel = functools.partial(autoencoder_kernel, input_dim=D, hidden_dim=H,
                               chunk_rows=chunk_rows)

    dec_p, dy_p = pl.pallas_call(
        kernel,
        out_shape=out_shape,
        grid=(num_tiles,),
        in_specs=[stream] + [smem] * 8,
        out_specs=(stream, stream),
        compiler_params=pltpu.CompilerParams(
            dimension_semantics=("parallel",),
        ),
    )(x_planes,
      we1.reshape(-1), be1.reshape(-1), we2.reshape(-1), be2.reshape(-1),
      wd1.reshape(-1), bd1.reshape(-1), wd2.reshape(-1), bd2.reshape(-1))

    dec = dec_p.reshape(D, n_pad)[:, :N].T
    dy = dy_p.reshape(D, n_pad)[:, :N].T
    return dec, dy


# ---------------------------------------------------------------------------
# Params (torch layout: weights (out, in) ~ N(0, 0.01), biases zero (out,))
# ---------------------------------------------------------------------------
def init_params(key, input_dim=2, encode_dim=3):
    D = input_dim
    H = encode_dim ** 2
    k = jax.random.split(key, 4)
    we1 = 0.01 * jax.random.normal(k[0], (H, D), jnp.float32)
    we2 = 0.01 * jax.random.normal(k[1], (D, H), jnp.float32)
    wd1 = 0.01 * jax.random.normal(k[2], (H, D), jnp.float32)
    wd2 = 0.01 * jax.random.normal(k[3], (D, H), jnp.float32)
    be1 = jnp.zeros((H,), jnp.float32)
    be2 = jnp.zeros((D,), jnp.float32)
    bd1 = jnp.zeros((H,), jnp.float32)
    bd2 = jnp.zeros((D,), jnp.float32)
    return (we1, be1, we2, be2, wd1, bd1, wd2, bd2)


def reference_forward(x, params, input_dim):
    """Pure-JAX reference of the PyTorch forward for a sanity check."""
    we1, be1, we2, be2, wd1, bd1, wd2, bd2 = params
    hp = jax.lax.Precision.HIGHEST
    x2d = x.reshape(-1, input_dim).astype(jnp.float32)
    h = jax.nn.relu(jnp.dot(x2d, we1.T, precision=hp) + be1)
    z = jnp.dot(h, we2.T, precision=hp) + be2
    p = jax.nn.softmax(z, axis=1)
    dy = p / jnp.sum(p, axis=-1, keepdims=True)            # sharpen, T=1
    h2 = jax.nn.relu(jnp.dot(dy, wd1.T, precision=hp) + bd1)
    dec = jax.nn.softmax(jnp.dot(h2, wd2.T, precision=hp) + bd2, axis=1)
    return dec, dy


if __name__ == "__main__":
    input_dim = 2
    encode_dim = 3

    root = jax.random.PRNGKey(0)
    k_params, k_x1, k_x2 = jax.random.split(root, 3)
    params = init_params(k_params, input_dim=input_dim, encode_dim=encode_dim)

    # Small case (single tile, single chunk).
    x_small = jax.random.normal(k_x1, (8, input_dim), jnp.float32)
    dec, dy = autoencoder_forward(x_small, params, input_dim=input_dim)
    jax.block_until_ready((dec, dy))
    dec_ref, dy_ref = reference_forward(x_small, params, input_dim)
    assert jnp.allclose(dec, dec_ref, atol=2e-3, rtol=2e-3)
    assert jnp.allclose(dy, dy_ref, atol=2e-3, rtol=2e-3)

    # Larger case exercising the multi-tile grid and the chunked inner loop.
    x_big = jax.random.normal(k_x2, (2065, input_dim), jnp.float32)
    dec_b, dy_b = autoencoder_forward(x_big, params, input_dim=input_dim)
    jax.block_until_ready((dec_b, dy_b))
    dec_b_ref, dy_b_ref = reference_forward(x_big, params, input_dim)
    assert jnp.allclose(dec_b, dec_b_ref, atol=2e-3, rtol=2e-3)
    assert jnp.allclose(dy_b, dy_b_ref, atol=2e-3, rtol=2e-3)

    print("KERNEL_OK")
</pallas_src>

<mosaic_0001>
module attributes {stable_mosaic.version = 11 : i64} {
  func.func @autoencoder_kernel(%arg0: i32, %arg1: memref<2x1x128xf32, #tpu.memory_space<vmem>>, %arg2: memref<18xf32, #tpu.memory_space<smem>>, %arg3: memref<9xf32, #tpu.memory_space<smem>>, %arg4: memref<18xf32, #tpu.memory_space<smem>>, %arg5: memref<2xf32, #tpu.memory_space<smem>>, %arg6: memref<18xf32, #tpu.memory_space<smem>>, %arg7: memref<9xf32, #tpu.memory_space<smem>>, %arg8: memref<18xf32, #tpu.memory_space<smem>>, %arg9: memref<2xf32, #tpu.memory_space<smem>>, %arg10: memref<2x1x128xf32, #tpu.memory_space<vmem>>, %arg11: memref<2x1x128xf32, #tpu.memory_space<vmem>>) attributes {dimension_semantics = [#tpu.dimension_semantics<parallel>], iteration_bounds = array<i64: 1>, scalar_prefetch = 0 : i64, scratch_operands = 0 : i64, tpu.core_type = #tpu.core_type<tc>, window_params = [{transform_indices = @transform_0, window_bounds = array<i64: 2, 1, 128>}, {transform_indices = @transform_1, window_bounds = array<i64: 18>}, {transform_indices = @transform_2, window_bounds = array<i64: 9>}, {transform_indices = @transform_3, window_bounds = array<i64: 18>}, {transform_indices = @transform_4, window_bounds = array<i64: 2>}, {transform_indices = @transform_5, window_bounds = array<i64: 18>}, {transform_indices = @transform_6, window_bounds = array<i64: 9>}, {transform_indices = @transform_7, window_bounds = array<i64: 18>}, {transform_indices = @transform_8, window_bounds = array<i64: 2>}, {transform_indices = @transform_9, window_bounds = array<i64: 2, 1, 128>}, {transform_indices = @transform_10, window_bounds = array<i64: 2, 1, 128>}]} {
    %c0 = arith.constant 0 : index
    %0 = memref.load %arg2[%c0] : memref<18xf32, #tpu.memory_space<smem>>
    %c1 = arith.constant 1 : index
    %1 = memref.load %arg2[%c1] : memref<18xf32, #tpu.memory_space<smem>>
    %c2 = arith.constant 2 : index
    %2 = memref.load %arg2[%c2] : memref<18xf32, #tpu.memory_space<smem>>
    %c3 = arith.constant 3 : index
    %3 = memref.load %arg2[%c3] : memref<18xf32, #tpu.memory_space<smem>>
    %c4 = arith.constant 4 : index
    %4 = memref.load %arg2[%c4] : memref<18xf32, #tpu.memory_space<smem>>
    %c5 = arith.constant 5 : index
    %5 = memref.load %arg2[%c5] : memref<18xf32, #tpu.memory_space<smem>>
    %c6 = arith.constant 6 : index
    %6 = memref.load %arg2[%c6] : memref<18xf32, #tpu.memory_space<smem>>
    %c7 = arith.constant 7 : index
    %7 = memref.load %arg2[%c7] : memref<18xf32, #tpu.memory_space<smem>>
    %c8 = arith.constant 8 : index
    %8 = memref.load %arg2[%c8] : memref<18xf32, #tpu.memory_space<smem>>
    %c9 = arith.constant 9 : index
    %9 = memref.load %arg2[%c9] : memref<18xf32, #tpu.memory_space<smem>>
    %c10 = arith.constant 10 : index
    %10 = memref.load %arg2[%c10] : memref<18xf32, #tpu.memory_space<smem>>
    %c11 = arith.constant 11 : index
    %11 = memref.load %arg2[%c11] : memref<18xf32, #tpu.memory_space<smem>>
    %c12 = arith.constant 12 : index
    %12 = memref.load %arg2[%c12] : memref<18xf32, #tpu.memory_space<smem>>
    %c13 = arith.constant 13 : index
    %13 = memref.load %arg2[%c13] : memref<18xf32, #tpu.memory_space<smem>>
    %c14 = arith.constant 14 : index
    %14 = memref.load %arg2[%c14] : memref<18xf32, #tpu.memory_space<smem>>
    %c15 = arith.constant 15 : index
    %15 = memref.load %arg2[%c15] : memref<18xf32, #tpu.memory_space<smem>>
    %c16 = arith.constant 16 : index
    %16 = memref.load %arg2[%c16] : memref<18xf32, #tpu.memory_space<smem>>
    %c17 = arith.constant 17 : index
    %17 = memref.load %arg2[%c17] : memref<18xf32, #tpu.memory_space<smem>>
    %c0_0 = arith.constant 0 : index
    %18 = memref.load %arg3[%c0_0] : memref<9xf32, #tpu.memory_space<smem>>
    %c1_1 = arith.constant 1 : index
    %19 = memref.load %arg3[%c1_1] : memref<9xf32, #tpu.memory_space<smem>>
    %c2_2 = arith.constant 2 : index
    %20 = memref.load %arg3[%c2_2] : memref<9xf32, #tpu.memory_space<smem>>
    %c3_3 = arith.constant 3 : index
    %21 = memref.load %arg3[%c3_3] : memref<9xf32, #tpu.memory_space<smem>>
    %c4_4 = arith.constant 4 : index
    %22 = memref.load %arg3[%c4_4] : memref<9xf32, #tpu.memory_space<smem>>
    %c5_5 = arith.constant 5 : index
    %23 = memref.load %arg3[%c5_5] : memref<9xf32, #tpu.memory_space<smem>>
    %c6_6 = arith.constant 6 : index
    %24 = memref.load %arg3[%c6_6] : memref<9xf32, #tpu.memory_space<smem>>
    %c7_7 = arith.constant 7 : index
    %25 = memref.load %arg3[%c7_7] : memref<9xf32, #tpu.memory_space<smem>>
    %c8_8 = arith.constant 8 : index
    %26 = memref.load %arg3[%c8_8] : memref<9xf32, #tpu.memory_space<smem>>
    %c0_9 = arith.constant 0 : index
    %27 = memref.load %arg4[%c0_9] : memref<18xf32, #tpu.memory_space<smem>>
    %c1_10 = arith.constant 1 : index
    %28 = memref.load %arg4[%c1_10] : memref<18xf32, #tpu.memory_space<smem>>
    %c2_11 = arith.constant 2 : index
    %29 = memref.load %arg4[%c2_11] : memref<18xf32, #tpu.memory_space<smem>>
    %c3_12 = arith.constant 3 : index
    %30 = memref.load %arg4[%c3_12] : memref<18xf32, #tpu.memory_space<smem>>
    %c4_13 = arith.constant 4 : index
    %31 = memref.load %arg4[%c4_13] : memref<18xf32, #tpu.memory_space<smem>>
    %c5_14 = arith.constant 5 : index
    %32 = memref.load %arg4[%c5_14] : memref<18xf32, #tpu.memory_space<smem>>
    %c6_15 = arith.constant 6 : index
    %33 = memref.load %arg4[%c6_15] : memref<18xf32, #tpu.memory_space<smem>>
    %c7_16 = arith.constant 7 : index
    %34 = memref.load %arg4[%c7_16] : memref<18xf32, #tpu.memory_space<smem>>
    %c8_17 = arith.constant 8 : index
    %35 = memref.load %arg4[%c8_17] : memref<18xf32, #tpu.memory_space<smem>>
    %c9_18 = arith.constant 9 : index
    %36 = memref.load %arg4[%c9_18] : memref<18xf32, #tpu.memory_space<smem>>
    %c10_19 = arith.constant 10 : index
    %37 = memref.load %arg4[%c10_19] : memref<18xf32, #tpu.memory_space<smem>>
    %c11_20 = arith.constant 11 : index
    %38 = memref.load %arg4[%c11_20] : memref<18xf32, #tpu.memory_space<smem>>
    %c12_21 = arith.constant 12 : index
    %39 = memref.load %arg4[%c12_21] : memref<18xf32, #tpu.memory_space<smem>>
    %c13_22 = arith.constant 13 : index
    %40 = memref.load %arg4[%c13_22] : memref<18xf32, #tpu.memory_space<smem>>
    %c14_23 = arith.constant 14 : index
    %41 = memref.load %arg4[%c14_23] : memref<18xf32, #tpu.memory_space<smem>>
    %c15_24 = arith.constant 15 : index
    %42 = memref.load %arg4[%c15_24] : memref<18xf32, #tpu.memory_space<smem>>
    %c16_25 = arith.constant 16 : index
    %43 = memref.load %arg4[%c16_25] : memref<18xf32, #tpu.memory_space<smem>>
    %c17_26 = arith.constant 17 : index
    %44 = memref.load %arg4[%c17_26] : memref<18xf32, #tpu.memory_space<smem>>
    %c0_27 = arith.constant 0 : index
    %45 = memref.load %arg5[%c0_27] : memref<2xf32, #tpu.memory_space<smem>>
    %c1_28 = arith.constant 1 : index
    %46 = memref.load %arg5[%c1_28] : memref<2xf32, #tpu.memory_space<smem>>
    %c0_29 = arith.constant 0 : index
    %47 = memref.load %arg6[%c0_29] : memref<18xf32, #tpu.memory_space<smem>>
    %c1_30 = arith.constant 1 : index
    %48 = memref.load %arg6[%c1_30] : memref<18xf32, #tpu.memory_space<smem>>
    %c2_31 = arith.constant 2 : index
    %49 = memref.load %arg6[%c2_31] : memref<18xf32, #tpu.memory_space<smem>>
    %c3_32 = arith.constant 3 : index
    %50 = memref.load %arg6[%c3_32] : memref<18xf32, #tpu.memory_space<smem>>
    %c4_33 = arith.constant 4 : index
    %51 = memref.load %arg6[%c4_33] : memref<18xf32, #tpu.memory_space<smem>>
    %c5_34 = arith.constant 5 : index
    %52 = memref.load %arg6[%c5_34] : memref<18xf32, #tpu.memory_space<smem>>
    %c6_35 = arith.constant 6 : index
    %53 = memref.load %arg6[%c6_35] : memref<18xf32, #tpu.memory_space<smem>>
    %c7_36 = arith.constant 7 : index
    %54 = memref.load %arg6[%c7_36] : memref<18xf32, #tpu.memory_space<smem>>
    %c8_37 = arith.constant 8 : index
    %55 = memref.load %arg6[%c8_37] : memref<18xf32, #tpu.memory_space<smem>>
    %c9_38 = arith.constant 9 : index
    %56 = memref.load %arg6[%c9_38] : memref<18xf32, #tpu.memory_space<smem>>
    %c10_39 = arith.constant 10 : index
    %57 = memref.load %arg6[%c10_39] : memref<18xf32, #tpu.memory_space<smem>>
    %c11_40 = arith.constant 11 : index
    %58 = memref.load %arg6[%c11_40] : memref<18xf32, #tpu.memory_space<smem>>
    %c12_41 = arith.constant 12 : index
    %59 = memref.load %arg6[%c12_41] : memref<18xf32, #tpu.memory_space<smem>>
    %c13_42 = arith.constant 13 : index
    %60 = memref.load %arg6[%c13_42] : memref<18xf32, #tpu.memory_space<smem>>
    %c14_43 = arith.constant 14 : index
    %61 = memref.load %arg6[%c14_43] : memref<18xf32, #tpu.memory_space<smem>>
    %c15_44 = arith.constant 15 : index
    %62 = memref.load %arg6[%c15_44] : memref<18xf32, #tpu.memory_space<smem>>
    %c16_45 = arith.constant 16 : index
    %63 = memref.load %arg6[%c16_45] : memref<18xf32, #tpu.memory_space<smem>>
    %c17_46 = arith.constant 17 : index
    %64 = memref.load %arg6[%c17_46] : memref<18xf32, #tpu.memory_space<smem>>
    %c0_47 = arith.constant 0 : index
    %65 = memref.load %arg7[%c0_47] : memref<9xf32, #tpu.memory_space<smem>>
    %c1_48 = arith.constant 1 : index
    %66 = memref.load %arg7[%c1_48] : memref<9xf32, #tpu.memory_space<smem>>
    %c2_49 = arith.constant 2 : index
    %67 = memref.load %arg7[%c2_49] : memref<9xf32, #tpu.memory_space<smem>>
    %c3_50 = arith.constant 3 : index
    %68 = memref.load %arg7[%c3_50] : memref<9xf32, #tpu.memory_space<smem>>
    %c4_51 = arith.constant 4 : index
    %69 = memref.load %arg7[%c4_51] : memref<9xf32, #tpu.memory_space<smem>>
    %c5_52 = arith.constant 5 : index
    %70 = memref.load %arg7[%c5_52] : memref<9xf32, #tpu.memory_space<smem>>
    %c6_53 = arith.constant 6 : index
    %71 = memref.load %arg7[%c6_53] : memref<9xf32, #tpu.memory_space<smem>>
    %c7_54 = arith.constant 7 : index
    %72 = memref.load %arg7[%c7_54] : memref<9xf32, #tpu.memory_space<smem>>
    %c8_55 = arith.constant 8 : index
    %73 = memref.load %arg7[%c8_55] : memref<9xf32, #tpu.memory_space<smem>>
    %c0_56 = arith.constant 0 : index
    %74 = memref.load %arg8[%c0_56] : memref<18xf32, #tpu.memory_space<smem>>
    %c1_57 = arith.constant 1 : index
    %75 = memref.load %arg8[%c1_57] : memref<18xf32, #tpu.memory_space<smem>>
    %c2_58 = arith.constant 2 : index
    %76 = memref.load %arg8[%c2_58] : memref<18xf32, #tpu.memory_space<smem>>
    %c3_59 = arith.constant 3 : index
    %77 = memref.load %arg8[%c3_59] : memref<18xf32, #tpu.memory_space<smem>>
    %c4_60 = arith.constant 4 : index
    %78 = memref.load %arg8[%c4_60] : memref<18xf32, #tpu.memory_space<smem>>
    %c5_61 = arith.constant 5 : index
    %79 = memref.load %arg8[%c5_61] : memref<18xf32, #tpu.memory_space<smem>>
    %c6_62 = arith.constant 6 : index
    %80 = memref.load %arg8[%c6_62] : memref<18xf32, #tpu.memory_space<smem>>
    %c7_63 = arith.constant 7 : index
    %81 = memref.load %arg8[%c7_63] : memref<18xf32, #tpu.memory_space<smem>>
    %c8_64 = arith.constant 8 : index
    %82 = memref.load %arg8[%c8_64] : memref<18xf32, #tpu.memory_space<smem>>
    %c9_65 = arith.constant 9 : index
    %83 = memref.load %arg8[%c9_65] : memref<18xf32, #tpu.memory_space<smem>>
    %c10_66 = arith.constant 10 : index
    %84 = memref.load %arg8[%c10_66] : memref<18xf32, #tpu.memory_space<smem>>
    %c11_67 = arith.constant 11 : index
    %85 = memref.load %arg8[%c11_67] : memref<18xf32, #tpu.memory_space<smem>>
    %c12_68 = arith.constant 12 : index
    %86 = memref.load %arg8[%c12_68] : memref<18xf32, #tpu.memory_space<smem>>
    %c13_69 = arith.constant 13 : index
    %87 = memref.load %arg8[%c13_69] : memref<18xf32, #tpu.memory_space<smem>>
    %c14_70 = arith.constant 14 : index
    %88 = memref.load %arg8[%c14_70] : memref<18xf32, #tpu.memory_space<smem>>
    %c15_71 = arith.constant 15 : index
    %89 = memref.load %arg8[%c15_71] : memref<18xf32, #tpu.memory_space<smem>>
    %c16_72 = arith.constant 16 : index
    %90 = memref.load %arg8[%c16_72] : memref<18xf32, #tpu.memory_space<smem>>
    %c17_73 = arith.constant 17 : index
    %91 = memref.load %arg8[%c17_73] : memref<18xf32, #tpu.memory_space<smem>>
    %c0_74 = arith.constant 0 : index
    %92 = memref.load %arg9[%c0_74] : memref<2xf32, #tpu.memory_space<smem>>
    %c1_75 = arith.constant 1 : index
    %93 = memref.load %arg9[%c1_75] : memref<2xf32, #tpu.memory_space<smem>>
    %c0_i32 = arith.constant 0 : i32
    %c1_i32 = arith.constant 1 : i32
    %94 = arith.muli %c0_i32, %c1_i32 : i32
    %95 = tpu.assume_multiple %94, 1 : i32
    %c0_76 = arith.constant 0 : index
    %96 = arith.index_cast %95 : i32 to index
    %c0_77 = arith.constant 0 : index
    %97 = vector.load %arg1[%c0_76, %96, %c0_77] : memref<2x1x128xf32, #tpu.memory_space<vmem>>, vector<1x1x128xf32>
    %98 = vector.shape_cast %97 : vector<1x1x128xf32> to vector<1x128xf32>
    %c1_78 = arith.constant 1 : index
    %99 = arith.index_cast %95 : i32 to index
    %c0_79 = arith.constant 0 : index
    %100 = vector.load %arg1[%c1_78, %99, %c0_79] : memref<2x1x128xf32, #tpu.memory_space<vmem>>, vector<1x1x128xf32>
    %101 = vector.shape_cast %100 : vector<1x1x128xf32> to vector<1x128xf32>
    %102 = vector.broadcast %0 : f32 to vector<1x128xf32>
    %103 = arith.mulf %98, %102 : vector<1x128xf32>
    %104 = vector.broadcast %1 : f32 to vector<1x128xf32>
    %105 = arith.mulf %101, %104 : vector<1x128xf32>
    %106 = arith.addf %103, %105 : vector<1x128xf32>
    %107 = vector.broadcast %18 : f32 to vector<1x128xf32>
    %108 = arith.addf %106, %107 : vector<1x128xf32>
    %cst = arith.constant 0.000000e+00 : f32
    %109 = vector.broadcast %cst : f32 to vector<1x128xf32>
    %110 = arith.maximumf %108, %109 : vector<1x128xf32>
    %111 = vector.broadcast %2 : f32 to vector<1x128xf32>
    %112 = arith.mulf %98, %111 : vector<1x128xf32>
    %113 = vector.broadcast %3 : f32 to vector<1x128xf32>
    %114 = arith.mulf %101, %113 : vector<1x128xf32>
    %115 = arith.addf %112, %114 : vector<1x128xf32>
    %116 = vector.broadcast %19 : f32 to vector<1x128xf32>
    %117 = arith.addf %115, %116 : vector<1x128xf32>
    %cst_80 = arith.constant 0.000000e+00 : f32
    %118 = vector.broadcast %cst_80 : f32 to vector<1x128xf32>
    %119 = arith.maximumf %117, %118 : vector<1x128xf32>
    %120 = vector.broadcast %4 : f32 to vector<1x128xf32>
    %121 = arith.mulf %98, %120 : vector<1x128xf32>
    %122 = vector.broadcast %5 : f32 to vector<1x128xf32>
    %123 = arith.mulf %101, %122 : vector<1x128xf32>
    %124 = arith.addf %121, %123 : vector<1x128xf32>
    %125 = vector.broadcast %20 : f32 to vector<1x128xf32>
    %126 = arith.addf %124, %125 : vector<1x128xf32>
    %cst_81 = arith.constant 0.000000e+00 : f32
    %127 = vector.broadcast %cst_81 : f32 to vector<1x128xf32>
    %128 = arith.maximumf %126, %127 : vector<1x128xf32>
    %129 = vector.broadcast %6 : f32 to vector<1x128xf32>
    %130 = arith.mulf %98, %129 : vector<1x128xf32>
    %131 = vector.broadcast %7 : f32 to vector<1x128xf32>
    %132 = arith.mulf %101, %131 : vector<1x128xf32>
    %133 = arith.addf %130, %132 : vector<1x128xf32>
    %134 = vector.broadcast %21 : f32 to vector<1x128xf32>
    %135 = arith.addf %133, %134 : vector<1x128xf32>
    %cst_82 = arith.constant 0.000000e+00 : f32
    %136 = vector.broadcast %cst_82 : f32 to vector<1x128xf32>
    %137 = arith.maximumf %135, %136 : vector<1x128xf32>
    %138 = vector.broadcast %8 : f32 to vector<1x128xf32>
    %139 = arith.mulf %98, %138 : vector<1x128xf32>
    %140 = vector.broadcast %9 : f32 to vector<1x128xf32>
    %141 = arith.mulf %101, %140 : vector<1x128xf32>
    %142 = arith.addf %139, %141 : vector<1x128xf32>
    %143 = vector.broadcast %22 : f32 to vector<1x128xf32>
    %144 = arith.addf %142, %143 : vector<1x128xf32>
    %cst_83 = arith.constant 0.000000e+00 : f32
    %145 = vector.broadcast %cst_83 : f32 to vector<1x128xf32>
    %146 = arith.maximumf %144, %145 : vector<1x128xf32>
    %147 = vector.broadcast %10 : f32 to vector<1x128xf32>
    %148 = arith.mulf %98, %147 : vector<1x128xf32>
    %149 = vector.broadcast %11 : f32 to vector<1x128xf32>
    %150 = arith.mulf %101, %149 : vector<1x128xf32>
    %151 = arith.addf %148, %150 : vector<1x128xf32>
    %152 = vector.broadcast %23 : f32 to vector<1x128xf32>
    %153 = arith.addf %151, %152 : vector<1x128xf32>
    %cst_84 = arith.constant 0.000000e+00 : f32
    %154 = vector.broadcast %cst_84 : f32 to vector<1x128xf32>
    %155 = arith.maximumf %153, %154 : vector<1x128xf32>
    %156 = vector.broadcast %12 : f32 to vector<1x128xf32>
    %157 = arith.mulf %98, %156 : vector<1x128xf32>
    %158 = vector.broadcast %13 : f32 to vector<1x128xf32>
    %159 = arith.mulf %101, %158 : vector<1x128xf32>
    %160 = arith.addf %157, %159 : vector<1x128xf32>
    %161 = vector.broadcast %24 : f32 to vector<1x128xf32>
    %162 = arith.addf %160, %161 : vector<1x128xf32>
    %cst_85 = arith.constant 0.000000e+00 : f32
    %163 = vector.broadcast %cst_85 : f32 to vector<1x128xf32>
    %164 = arith.maximumf %162, %163 : vector<1x128xf32>
    %165 = vector.broadcast %14 : f32 to vector<1x128xf32>
    %166 = arith.mulf %98, %165 : vector<1x128xf32>
    %167 = vector.broadcast %15 : f32 to vector<1x128xf32>
    %168 = arith.mulf %101, %167 : vector<1x128xf32>
    %169 = arith.addf %166, %168 : vector<1x128xf32>
    %170 = vector.broadcast %25 : f32 to vector<1x128xf32>
    %171 = arith.addf %169, %170 : vector<1x128xf32>
    %cst_86 = arith.constant 0.000000e+00 : f32
    %172 = vector.broadcast %cst_86 : f32 to vector<1x128xf32>
    %173 = arith.maximumf %171, %172 : vector<1x128xf32>
    %174 = vector.broadcast %16 : f32 to vector<1x128xf32>
    %175 = arith.mulf %98, %174 : vector<1x128xf32>
    %176 = vector.broadcast %17 : f32 to vector<1x128xf32>
    %177 = arith.mulf %101, %176 : vector<1x128xf32>
    %178 = arith.addf %175, %177 : vector<1x128xf32>
    %179 = vector.broadcast %26 : f32 to vector<1x128xf32>
    %180 = arith.addf %178, %179 : vector<1x128xf32>
    %cst_87 = arith.constant 0.000000e+00 : f32
    %181 = vector.broadcast %cst_87 : f32 to vector<1x128xf32>
    %182 = arith.maximumf %180, %181 : vector<1x128xf32>
    %183 = vector.broadcast %27 : f32 to vector<1x128xf32>
    %184 = arith.mulf %110, %183 : vector<1x128xf32>
    %185 = vector.broadcast %28 : f32 to vector<1x128xf32>
    %186 = arith.mulf %119, %185 : vector<1x128xf32>
    %187 = arith.addf %184, %186 : vector<1x128xf32>
    %188 = vector.broadcast %29 : f32 to vector<1x128xf32>
    %189 = arith.mulf %128, %188 : vector<1x128xf32>
    %190 = arith.addf %187, %189 : vector<1x128xf32>
    %191 = vector.broadcast %30 : f32 to vector<1x128xf32>
    %192 = arith.mulf %137, %191 : vector<1x128xf32>
    %193 = arith.addf %190, %192 : vector<1x128xf32>
    %194 = vector.broadcast %31 : f32 to vector<1x128xf32>
    %195 = arith.mulf %146, %194 : vector<1x128xf32>
    %196 = arith.addf %193, %195 : vector<1x128xf32>
    %197 = vector.broadcast %32 : f32 to vector<1x128xf32>
    %198 = arith.mulf %155, %197 : vector<1x128xf32>
    %199 = arith.addf %196, %198 : vector<1x128xf32>
    %200 = vector.broadcast %33 : f32 to vector<1x128xf32>
    %201 = arith.mulf %164, %200 : vector<1x128xf32>
    %202 = arith.addf %199, %201 : vector<1x128xf32>
    %203 = vector.broadcast %34 : f32 to vector<1x128xf32>
    %204 = arith.mulf %173, %203 : vector<1x128xf32>
    %205 = arith.addf %202, %204 : vector<1x128xf32>
    %206 = vector.broadcast %35 : f32 to vector<1x128xf32>
    %207 = arith.mulf %182, %206 : vector<1x128xf32>
    %208 = arith.addf %205, %207 : vector<1x128xf32>
    %209 = vector.broadcast %45 : f32 to vector<1x128xf32>
    %210 = arith.addf %208, %209 : vector<1x128xf32>
    %211 = vector.broadcast %36 : f32 to vector<1x128xf32>
    %212 = arith.mulf %110, %211 : vector<1x128xf32>
    %213 = vector.broadcast %37 : f32 to vector<1x128xf32>
    %214 = arith.mulf %119, %213 : vector<1x128xf32>
    %215 = arith.addf %212, %214 : vector<1x128xf32>
    %216 = vector.broadcast %38 : f32 to vector<1x128xf32>
    %217 = arith.mulf %128, %216 : vector<1x128xf32>
    %218 = arith.addf %215, %217 : vector<1x128xf32>
    %219 = vector.broadcast %39 : f32 to vector<1x128xf32>
    %220 = arith.mulf %137, %219 : vector<1x128xf32>
    %221 = arith.addf %218, %220 : vector<1x128xf32>
    %222 = vector.broadcast %40 : f32 to vector<1x128xf32>
    %223 = arith.mulf %146, %222 : vector<1x128xf32>
    %224 = arith.addf %221, %223 : vector<1x128xf32>
    %225 = vector.broadcast %41 : f32 to vector<1x128xf32>
    %226 = arith.mulf %155, %225 : vector<1x128xf32>
    %227 = arith.addf %224, %226 : vector<1x128xf32>
    %228 = vector.broadcast %42 : f32 to vector<1x128xf32>
    %229 = arith.mulf %164, %228 : vector<1x128xf32>
    %230 = arith.addf %227, %229 : vector<1x128xf32>
    %231 = vector.broadcast %43 : f32 to vector<1x128xf32>
    %232 = arith.mulf %173, %231 : vector<1x128xf32>
    %233 = arith.addf %230, %232 : vector<1x128xf32>
    %234 = vector.broadcast %44 : f32 to vector<1x128xf32>
    %235 = arith.mulf %182, %234 : vector<1x128xf32>
    %236 = arith.addf %233, %235 : vector<1x128xf32>
    %237 = vector.broadcast %46 : f32 to vector<1x128xf32>
    %238 = arith.addf %236, %237 : vector<1x128xf32>
    %239 = arith.maximumf %210, %238 : vector<1x128xf32>
    %240 = arith.subf %210, %239 : vector<1x128xf32>
    %241 = math.exp %240 : vector<1x128xf32>
    %242 = arith.subf %238, %239 : vector<1x128xf32>
    %243 = math.exp %242 : vector<1x128xf32>
    %244 = arith.addf %241, %243 : vector<1x128xf32>
    %245 = tpu.reciprocal %244 {approx = true} : vector<1x128xf32> -> vector<1x128xf32>
    %246 = arith.mulf %241, %245 : vector<1x128xf32>
    %247 = arith.mulf %243, %245 : vector<1x128xf32>
    %248 = arith.addf %246, %247 : vector<1x128xf32>
    %249 = tpu.reciprocal %248 {approx = true} : vector<1x128xf32> -> vector<1x128xf32>
    %250 = arith.mulf %246, %249 : vector<1x128xf32>
    %251 = arith.mulf %247, %249 : vector<1x128xf32>
    %c0_88 = arith.constant 0 : index
    %252 = arith.index_cast %95 : i32 to index
    %c0_89 = arith.constant 0 : index
    %253 = vector.load %arg11[%c0_88, %252, %c0_89] : memref<2x1x128xf32, #tpu.memory_space<vmem>>, vector<1x1x128xf32>
    %254 = vector.shape_cast %253 : vector<1x1x128xf32> to vector<1x128xf32>
    %255 = vector.shape_cast %250 : vector<1x128xf32> to vector<1x1x128xf32>
    tpu.vector_store %arg11[%c0_88, %252, %c0_89], %255 {strides = array<i32>} : memref<2x1x128xf32, #tpu.memory_space<vmem>>, vector<1x1x128xf32>,
    %c1_90 = arith.constant 1 : index
    %256 = arith.index_cast %95 : i32 to index
    %c0_91 = arith.constant 0 : index
    %257 = vector.load %arg11[%c1_90, %256, %c0_91] : memref<2x1x128xf32, #tpu.memory_space<vmem>>, vector<1x1x128xf32>
    %258 = vector.shape_cast %257 : vector<1x1x128xf32> to vector<1x128xf32>
    %259 = vector.shape_cast %251 : vector<1x128xf32> to vector<1x1x128xf32>
    tpu.vector_store %arg11[%c1_90, %256, %c0_91], %259 {strides = array<i32>} : memref<2x1x128xf32, #tpu.memory_space<vmem>>, vector<1x1x128xf32>,
    %260 = vector.broadcast %47 : f32 to vector<1x128xf32>
    %261 = arith.mulf %250, %260 : vector<1x128xf32>
    %262 = vector.broadcast %48 : f32 to vector<1x128xf32>
    %263 = arith.mulf %251, %262 : vector<1x128xf32>
    %264 = arith.addf %261, %263 : vector<1x128xf32>
    %265 = vector.broadcast %65 : f32 to vector<1x128xf32>
    %266 = arith.addf %264, %265 : vector<1x128xf32>
    %cst_92 = arith.constant 0.000000e+00 : f32
    %267 = vector.broadcast %cst_92 : f32 to vector<1x128xf32>
    %268 = arith.maximumf %266, %267 : vector<1x128xf32>
    %269 = vector.broadcast %49 : f32 to vector<1x128xf32>
    %270 = arith.mulf %250, %269 : vector<1x128xf32>
    %271 = vector.broadcast %50 : f32 to vector<1x128xf32>
    %272 = arith.mulf %251, %271 : vector<1x128xf32>
    %273 = arith.addf %270, %272 : vector<1x128xf32>
    %274 = vector.broadcast %66 : f32 to vector<1x128xf32>
    %275 = arith.addf %273, %274 : vector<1x128xf32>
    %cst_93 = arith.constant 0.000000e+00 : f32
    %276 = vector.broadcast %cst_93 : f32 to vector<1x128xf32>
    %277 = arith.maximumf %275, %276 : vector<1x128xf32>
    %278 = vector.broadcast %51 : f32 to vector<1x128xf32>
    %279 = arith.mulf %250, %278 : vector<1x128xf32>
    %280 = vector.broadcast %52 : f32 to vector<1x128xf32>
    %281 = arith.mulf %251, %280 : vector<1x128xf32>
    %282 = arith.addf %279, %281 : vector<1x128xf32>
    %283 = vector.broadcast %67 : f32 to vector<1x128xf32>
    %284 = arith.addf %282, %283 : vector<1x128xf32>
    %cst_94 = arith.constant 0.000000e+00 : f32
    %285 = vector.broadcast %cst_94 : f32 to vector<1x128xf32>
    %286 = arith.maximumf %284, %285 : vector<1x128xf32>
    %287 = vector.broadcast %53 : f32 to vector<1x128xf32>
    %288 = arith.mulf %250, %287 : vector<1x128xf32>
    %289 = vector.broadcast %54 : f32 to vector<1x128xf32>
    %290 = arith.mulf %251, %289 : vector<1x128xf32>
    %291 = arith.addf %288, %290 : vector<1x128xf32>
    %292 = vector.broadcast %68 : f32 to vector<1x128xf32>
    %293 = arith.addf %291, %292 : vector<1x128xf32>
    %cst_95 = arith.constant 0.000000e+00 : f32
    %294 = vector.broadcast %cst_95 : f32 to vector<1x128xf32>
    %295 = arith.maximumf %293, %294 : vector<1x128xf32>
    %296 = vector.broadcast %55 : f32 to vector<1x128xf32>
    %297 = arith.mulf %250, %296 : vector<1x128xf32>
    %298 = vector.broadcast %56 : f32 to vector<1x128xf32>
    %299 = arith.mulf %251, %298 : vector<1x128xf32>
    %300 = arith.addf %297, %299 : vector<1x128xf32>
    %301 = vector.broadcast %69 : f32 to vector<1x128xf32>
    %302 = arith.addf %300, %301 : vector<1x128xf32>
    %cst_96 = arith.constant 0.000000e+00 : f32
    %303 = vector.broadcast %cst_96 : f32 to vector<1x128xf32>
    %304 = arith.maximumf %302, %303 : vector<1x128xf32>
    %305 = vector.broadcast %57 : f32 to vector<1x128xf32>
    %306 = arith.mulf %250, %305 : vector<1x128xf32>
    %307 = vector.broadcast %58 : f32 to vector<1x128xf32>
    %308 = arith.mulf %251, %307 : vector<1x128xf32>
    %309 = arith.addf %306, %308 : vector<1x128xf32>
    %310 = vector.broadcast %70 : f32 to vector<1x128xf32>
    %311 = arith.addf %309, %310 : vector<1x128xf32>
    %cst_97 = arith.constant 0.000000e+00 : f32
    %312 = vector.broadcast %cst_97 : f32 to vector<1x128xf32>
    %313 = arith.maximumf %311, %312 : vector<1x128xf32>
    %314 = vector.broadcast %59 : f32 to vector<1x128xf32>
    %315 = arith.mulf %250, %314 : vector<1x128xf32>
    %316 = vector.broadcast %60 : f32 to vector<1x128xf32>
    %317 = arith.mulf %251, %316 : vector<1x128xf32>
    %318 = arith.addf %315, %317 : vector<1x128xf32>
    %319 = vector.broadcast %71 : f32 to vector<1x128xf32>
    %320 = arith.addf %318, %319 : vector<1x128xf32>
    %cst_98 = arith.constant 0.000000e+00 : f32
    %321 = vector.broadcast %cst_98 : f32 to vector<1x128xf32>
    %322 = arith.maximumf %320, %321 : vector<1x128xf32>
    %323 = vector.broadcast %61 : f32 to vector<1x128xf32>
    %324 = arith.mulf %250, %323 : vector<1x128xf32>
    %325 = vector.broadcast %62 : f32 to vector<1x128xf32>
    %326 = arith.mulf %251, %325 : vector<1x128xf32>
    %327 = arith.addf %324, %326 : vector<1x128xf32>
    %328 = vector.broadcast %72 : f32 to vector<1x128xf32>
    %329 = arith.addf %327, %328 : vector<1x128xf32>
    %cst_99 = arith.constant 0.000000e+00 : f32
    %330 = vector.broadcast %cst_99 : f32 to vector<1x128xf32>
    %331 = arith.maximumf %329, %330 : vector<1x128xf32>
    %332 = vector.broadcast %63 : f32 to vector<1x128xf32>
    %333 = arith.mulf %250, %332 : vector<1x128xf32>
    %334 = vector.broadcast %64 : f32 to vector<1x128xf32>
    %335 = arith.mulf %251, %334 : vector<1x128xf32>
    %336 = arith.addf %333, %335 : vector<1x128xf32>
    %337 = vector.broadcast %73 : f32 to vector<1x128xf32>
    %338 = arith.addf %336, %337 : vector<1x128xf32>
    %cst_100 = arith.constant 0.000000e+00 : f32
    %339 = vector.broadcast %cst_100 : f32 to vector<1x128xf32>
    %340 = arith.maximumf %338, %339 : vector<1x128xf32>
    %341 = vector.broadcast %74 : f32 to vector<1x128xf32>
    %342 = arith.mulf %268, %341 : vector<1x128xf32>
    %343 = vector.broadcast %75 : f32 to vector<1x128xf32>
    %344 = arith.mulf %277, %343 : vector<1x128xf32>
    %345 = arith.addf %342, %344 : vector<1x128xf32>
    %346 = vector.broadcast %76 : f32 to vector<1x128xf32>
    %347 = arith.mulf %286, %346 : vector<1x128xf32>
    %348 = arith.addf %345, %347 : vector<1x128xf32>
    %349 = vector.broadcast %77 : f32 to vector<1x128xf32>
    %350 = arith.mulf %295, %349 : vector<1x128xf32>
    %351 = arith.addf %348, %350 : vector<1x128xf32>
    %352 = vector.broadcast %78 : f32 to vector<1x128xf32>
    %353 = arith.mulf %304, %352 : vector<1x128xf32>
    %354 = arith.addf %351, %353 : vector<1x128xf32>
    %355 = vector.broadcast %79 : f32 to vector<1x128xf32>
    %356 = arith.mulf %313, %355 : vector<1x128xf32>
    %357 = arith.addf %354, %356 : vector<1x128xf32>
    %358 = vector.broadcast %80 : f32 to vector<1x128xf32>
    %359 = arith.mulf %322, %358 : vector<1x128xf32>
    %360 = arith.addf %357, %359 : vector<1x128xf32>
    %361 = vector.broadcast %81 : f32 to vector<1x128xf32>
    %362 = arith.mulf %331, %361 : vector<1x128xf32>
    %363 = arith.addf %360, %362 : vector<1x128xf32>
    %364 = vector.broadcast %82 : f32 to vector<1x128xf32>
    %365 = arith.mulf %340, %364 : vector<1x128xf32>
    %366 = arith.addf %363, %365 : vector<1x128xf32>
    %367 = vector.broadcast %92 : f32 to vector<1x128xf32>
    %368 = arith.addf %366, %367 : vector<1x128xf32>
    %369 = vector.broadcast %83 : f32 to vector<1x128xf32>
    %370 = arith.mulf %268, %369 : vector<1x128xf32>
    %371 = vector.broadcast %84 : f32 to vector<1x128xf32>
    %372 = arith.mulf %277, %371 : vector<1x128xf32>
    %373 = arith.addf %370, %372 : vector<1x128xf32>
    %374 = vector.broadcast %85 : f32 to vector<1x128xf32>
    %375 = arith.mulf %286, %374 : vector<1x128xf32>
    %376 = arith.addf %373, %375 : vector<1x128xf32>
    %377 = vector.broadcast %86 : f32 to vector<1x128xf32>
    %378 = arith.mulf %295, %377 : vector<1x128xf32>
    %379 = arith.addf %376, %378 : vector<1x128xf32>
    %380 = vector.broadcast %87 : f32 to vector<1x128xf32>
    %381 = arith.mulf %304, %380 : vector<1x128xf32>
    %382 = arith.addf %379, %381 : vector<1x128xf32>
    %383 = vector.broadcast %88 : f32 to vector<1x128xf32>
    %384 = arith.mulf %313, %383 : vector<1x128xf32>
    %385 = arith.addf %382, %384 : vector<1x128xf32>
    %386 = vector.broadcast %89 : f32 to vector<1x128xf32>
    %387 = arith.mulf %322, %386 : vector<1x128xf32>
    %388 = arith.addf %385, %387 : vector<1x128xf32>
    %389 = vector.broadcast %90 : f32 to vector<1x128xf32>
    %390 = arith.mulf %331, %389 : vector<1x128xf32>
    %391 = arith.addf %388, %390 : vector<1x128xf32>
    %392 = vector.broadcast %91 : f32 to vector<1x128xf32>
    %393 = arith.mulf %340, %392 : vector<1x128xf32>
    %394 = arith.addf %391, %393 : vector<1x128xf32>
    %395 = vector.broadcast %93 : f32 to vector<1x128xf32>
    %396 = arith.addf %394, %395 : vector<1x128xf32>
    %397 = arith.maximumf %368, %396 : vector<1x128xf32>
    %398 = arith.subf %368, %397 : vector<1x128xf32>
    %399 = math.exp %398 : vector<1x128xf32>
    %400 = arith.subf %396, %397 : vector<1x128xf32>
    %401 = math.exp %400 : vector<1x128xf32>
    %402 = arith.addf %399, %401 : vector<1x128xf32>
    %403 = tpu.reciprocal %402 {approx = true} : vector<1x128xf32> -> vector<1x128xf32>
    %404 = arith.mulf %399, %403 : vector<1x128xf32>
    %405 = arith.mulf %401, %403 : vector<1x128xf32>
    %c0_101 = arith.constant 0 : index
    %406 = arith.index_cast %95 : i32 to index
    %c0_102 = arith.constant 0 : index
    %407 = vector.load %arg10[%c0_101, %406, %c0_102] : memref<2x1x128xf32, #tpu.memory_space<vmem>>, vector<1x1x128xf32>
    %408 = vector.shape_cast %407 : vector<1x1x128xf32> to vector<1x128xf32>
    %409 = vector.shape_cast %404 : vector<1x128xf32> to vector<1x1x128xf32>
    tpu.vector_store %arg10[%c0_101, %406, %c0_102], %409 {strides = array<i32>} : memref<2x1x128xf32, #tpu.memory_space<vmem>>, vector<1x1x128xf32>,
    %c1_103 = arith.constant 1 : index
    %410 = arith.index_cast %95 : i32 to index
    %c0_104 = arith.constant 0 : index
    %411 = vector.load %arg10[%c1_103, %410, %c0_104] : memref<2x1x128xf32, #tpu.memory_space<vmem>>, vector<1x1x128xf32>
    %412 = vector.shape_cast %411 : vector<1x1x128xf32> to vector<1x128xf32>
    %413 = vector.shape_cast %405 : vector<1x128xf32> to vector<1x1x128xf32>
    tpu.vector_store %arg10[%c1_103, %410, %c0_104], %413 {strides = array<i32>} : memref<2x1x128xf32, #tpu.memory_space<vmem>>, vector<1x1x128xf32>,
    %c1_i32_105 = arith.constant 1 : i32
    return
  }
  func.func @transform_0(%arg0: i32) -> (i32, i32, i32) {
    %c0_i32 = arith.constant 0 : i32
    %c0_i32_0 = arith.constant 0 : i32
    %c0_i32_1 = arith.constant 0 : i32
    return %c0_i32, %arg0, %c0_i32_0 : i32, i32, i32
  }
  func.func @transform_1(%arg0: i32) -> i32 {
    %c0_i32 = arith.constant 0 : i32
    %c0_i32_0 = arith.constant 0 : i32
    return %c0_i32 : i32
  }
  func.func @transform_2(%arg0: i32) -> i32 {
    %c0_i32 = arith.constant 0 : i32
    %c0_i32_0 = arith.constant 0 : i32
    return %c0_i32 : i32
  }
  func.func @transform_3(%arg0: i32) -> i32 {
    %c0_i32 = arith.constant 0 : i32
    %c0_i32_0 = arith.constant 0 : i32
    return %c0_i32 : i32
  }
  func.func @transform_4(%arg0: i32) -> i32 {
    %c0_i32 = arith.constant 0 : i32
    %c0_i32_0 = arith.constant 0 : i32
    return %c0_i32 : i32
  }
  func.func @transform_5(%arg0: i32) -> i32 {
    %c0_i32 = arith.constant 0 : i32
    %c0_i32_0 = arith.constant 0 : i32
    return %c0_i32 : i32
  }
  func.func @transform_6(%arg0: i32) -> i32 {
    %c0_i32 = arith.constant 0 : i32
    %c0_i32_0 = arith.constant 0 : i32
    return %c0_i32 : i32
  }
  func.func @transform_7(%arg0: i32) -> i32 {
    %c0_i32 = arith.constant 0 : i32
    %c0_i32_0 = arith.constant 0 : i32
    return %c0_i32 : i32
  }
  func.func @transform_8(%arg0: i32) -> i32 {
    %c0_i32 = arith.constant 0 : i32
    %c0_i32_0 = arith.constant 0 : i32
    return %c0_i32 : i32
  }
  func.func @transform_9(%arg0: i32) -> (i32, i32, i32) {
    %c0_i32 = arith.constant 0 : i32
    %c0_i32_0 = arith.constant 0 : i32
    %c0_i32_1 = arith.constant 0 : i32
    return %c0_i32, %arg0, %c0_i32_0 : i32, i32, i32
  }
  func.func @transform_10(%arg0: i32) -> (i32, i32, i32) {
    %c0_i32 = arith.constant 0 : i32
    %c0_i32_0 = arith.constant 0 : i32
    %c0_i32_1 = arith.constant 0 : i32
    return %c0_i32, %arg0, %c0_i32_0 : i32, i32, i32
  }
}

</mosaic_0001>

<llo_original>
// kernel: autoencoder_forward.1
$region0: #{autoencoder_forward.1}
  #allocation0 [shape = 'u32[]', space=smem, size = 0x4, offset = 0x4, fixed_abs, tag = 'smem constant byte address 0x4 - core index']
  #allocation1 [shape = 'u32[144,128]{1,0:T(1,128)}', space=vmem, size = 0x12000, scoped, tag = 'internal scratch']
  %s0 = inlined_call_operand.vmem [shape: f32[2,1,128], index: 0, kind: input, shape index: {}]
  %s1 = inlined_call_operand.vmem [shape: f32[18], index: 1, kind: input, shape index: {}]
  %s2 = inlined_call_operand.vmem [shape: f32[9], index: 2, kind: input, shape index: {}]
  %s3 = inlined_call_operand.vmem [shape: f32[18], index: 3, kind: input, shape index: {}]
  %s4 = inlined_call_operand.vmem [shape: f32[2], index: 4, kind: input, shape index: {}]
  %s5 = inlined_call_operand.vmem [shape: f32[18], index: 5, kind: input, shape index: {}]
  %s6 = inlined_call_operand.vmem [shape: f32[9], index: 6, kind: input, shape index: {}]
  %s7 = inlined_call_operand.vmem [shape: f32[18], index: 7, kind: input, shape index: {}]
  %s8 = inlined_call_operand.vmem [shape: f32[2], index: 8, kind: input, shape index: {}]
  %s9 = inlined_call_operand.vmem [shape: f32[2,1,128], index: 9, kind: output, shape index: {0}]
  %s10 = inlined_call_operand.vmem [shape: f32[2,1,128], index: 10, kind: output, shape index: {1}]
  %11 = xla_tuple %s9, %s10
  %s12 = sld [smem:[#allocation0]]
  $region86: #{autoencoder_forward.1} parent=0
    _
  %s14 = ssub.s32 1, %s12
  %s15 = scalar_select 0, %s14, %s12
  $region1: #{autoencoder_forward.1} parent=0
    #allocation2 [shape = 'u8[512]{0}', space=smem, size = 0x200, scoped, tag = 'input window, operand 1, single buffered']
    #allocation3 [shape = 's32[1]{0}', space=sflag, size = 0x4, scoped, tag = 'scoped memory for autoencoder_forward.1']
    #allocation4 [shape = 'u8[512]{0}', space=smem, size = 0x200, scoped, tag = 'input window, operand 2, single buffered']
    #allocation5 [shape = 's32[1]{0}', space=sflag, size = 0x4, scoped, tag = 'scoped memory for autoencoder_forward.1']
    #allocation6 [shape = 'u8[512]{0}', space=smem, size = 0x200, scoped, tag = 'input window, operand 3, single buffered']
    #allocation7 [shape = 'u8[512]{0}', space=smem, size = 0x200, scoped, tag = 'input window, operand 4, single buffered']
    #allocation8 [shape = 's32[1]{0}', space=sflag, size = 0x4, scoped, tag = 'scoped memory for autoencoder_forward.1']
    #allocation9 [shape = 'u8[512]{0}', space=smem, size = 0x200, scoped, tag = 'input window, operand 5, single buffered']
    #allocation10 [shape = 'u8[512]{0}', space=smem, size = 0x200, scoped, tag = 'input window, operand 6, single buffered']
    #allocation11 [shape = 's32[1]{0}', space=sflag, size = 0x4, scoped, tag = 'scoped memory for autoencoder_forward.1']
    #allocation12 [shape = 'u8[512]{0}', space=smem, size = 0x200, scoped, tag = 'input window, operand 7, single buffered']
    #allocation13 [shape = 'u8[512]{0}', space=smem, size = 0x200, scoped, tag = 'input window, operand 8, single buffered']
    #allocation14 [shape = 's32[1]{0}', space=sflag, size = 0x4, scoped, tag = 'scoped memory for autoencoder_forward.1']
    %16 = vsyncpa [#allocation3], 0
    %17 = vsyncpa [#allocation5], 0
    %18 = vsyncpa [#allocation8], 0
    %19 = vsyncpa [#allocation11], 0
    %20 = vsyncpa [#allocation14], 0
    // Predicated region
    $region2: #{autoencoder_forward.1} parent=1 // pred_check
      _
    $region3: #{autoencoder_forward.1} parent=1 // pred_check_branch
      %22 = sbr.rel (0) target = $region5
    $region4: #{autoencoder_forward.1} parent=1 // pred_region
      _
    $region5: #{autoencoder_forward.1} parent=1 // pred_fallthru
      _
    // Predicated region
    $region6: #{autoencoder_forward.1} parent=1 // pred_check
      _
    $region7: #{autoencoder_forward.1} parent=1 // pred_check_branch
      %24 = sbr.rel (0) target = $region9
    $region8: #{autoencoder_forward.1} parent=1 // pred_region
      %s26 = ssub.s32 16, 16
      %27 = vsyncadd [#allocation3], %s26
      %s29 = sshll.u32 %s1, 4
      %s30 = int_to_ptr.vmem [resolvable:$true] %s29
      %32 = dma.vmem_to_smem %s30, 16, [#allocation2], [#allocation3]
    $region9: #{autoencoder_forward.1} parent=1 // pred_fallthru
      _
    // Predicated region
    $region10: #{autoencoder_forward.1} parent=1 // pred_check
      _
    $region11: #{autoencoder_forward.1} parent=1 // pred_check_branch
      %34 = sbr.rel (0) target = $region13
    $region12: #{autoencoder_forward.1} parent=1 // pred_region
      %s36 = ssub.s32 16, 16
      %37 = vsyncadd [#allocation5], %s36
      %s39 = sshll.u32 %s2, 4
      %s40 = int_to_ptr.vmem [resolvable:$true] %s39
      %42 = dma.vmem_to_smem %s40, 16, [#allocation4], [#allocation5]
    $region13: #{autoencoder_forward.1} parent=1 // pred_fallthru
      _
    // Predicated region
    $region14: #{autoencoder_forward.1} parent=1 // pred_check
      _
    $region15: #{autoencoder_forward.1} parent=1 // pred_check_branch
      %44 = sbr.rel (0) target = $region17
    $region16: #{autoencoder_forward.1} parent=1 // pred_region
      %s46 = ssub.s32 16, 16
      %47 = vsyncadd [#allocation5], %s46
      %s49 = sshll.u32 %s3, 4
      %s50 = int_to_ptr.vmem [resolvable:$true] %s49
      %52 = dma.vmem_to_smem %s50, 16, [#allocation6], [#allocation5]
    $region17: #{autoencoder_forward.1} parent=1 // pred_fallthru
      _
    // Predicated region
    $region18: #{autoencoder_forward.1} parent=1 // pred_check
      _
    $region19: #{autoencoder_forward.1} parent=1 // pred_check_branch
      %54 = sbr.rel (0) target = $region21
    $region20: #{autoencoder_forward.1} parent=1 // pred_region
      %s56 = ssub.s32 16, 16
      %57 = vsyncadd [#allocation8], %s56
      %s59 = sshll.u32 %s4, 4
      %s60 = int_to_ptr.vmem [resolvable:$true] %s59
      %62 = dma.vmem_to_smem %s60, 16, [#allocation7], [#allocation8]
    $region21: #{autoencoder_forward.1} parent=1 // pred_fallthru
      _
    // Predicated region
    $region22: #{autoencoder_forward.1} parent=1 // pred_check
      _
    $region23: #{autoencoder_forward.1} parent=1 // pred_check_branch
      %64 = sbr.rel (0) target = $region25
    $region24: #{autoencoder_forward.1} parent=1 // pred_region
      %s66 = ssub.s32 16, 16
      %67 = vsyncadd [#allocation8], %s66
      %s69 = sshll.u32 %s5, 4
      %s70 = int_to_ptr.vmem [resolvable:$true] %s69
      %72 = dma.vmem_to_smem %s70, 16, [#allocation9], [#allocation8]
    $region25: #{autoencoder_forward.1} parent=1 // pred_fallthru
      _
    // Predicated region
    $region26: #{autoencoder_forward.1} parent=1 // pred_check
      _
    $region27: #{autoencoder_forward.1} parent=1 // pred_check_branch
      %74 = sbr.rel (0) target = $region29
    $region28: #{autoencoder_forward.1} parent=1 // pred_region
      %s76 = ssub.s32 16, 16
      %77 = vsyncadd [#allocation11], %s76
      %s79 = sshll.u32 %s6, 4
      %s80 = int_to_ptr.vmem [resolvable:$true] %s79
      %82 = dma.vmem_to_smem %s80, 16, [#allocation10], [#allocation11]
    $region29: #{autoencoder_forward.1} parent=1 // pred_fallthru
      _
    // Predicated region
    $region30: #{autoencoder_forward.1} parent=1 // pred_check
      _
    $region31: #{autoencoder_forward.1} parent=1 // pred_check_branch
      %84 = sbr.rel (0) target = $region33
    $region32: #{autoencoder_forward.1} parent=1 // pred_region
      %s86 = ssub.s32 16, 16
      %87 = vsyncadd [#allocation11], %s86
      %s89 = sshll.u32 %s7, 4
      %s90 = int_to_ptr.vmem [resolvable:$true] %s89
      %92 = dma.vmem_to_smem %s90, 16, [#allocation12], [#allocation11]
    $region33: #{autoencoder_forward.1} parent=1 // pred_fallthru
      _
    // Predicated region
    $region34: #{autoencoder_forward.1} parent=1 // pred_check
      _
    $region35: #{autoencoder_forward.1} parent=1 // pred_check_branch
      %94 = sbr.rel (0) target = $region37
    $region36: #{autoencoder_forward.1} parent=1 // pred_region
      %s96 = ssub.s32 16, 16
      %97 = vsyncadd [#allocation14], %s96
      %s99 = sshll.u32 %s8, 4
      %s100 = int_to_ptr.vmem [resolvable:$true] %s99
      %102 = dma.vmem_to_smem %s100, 16, [#allocation13], [#allocation14]
    $region37: #{autoencoder_forward.1} parent=1 // pred_fallthru
      _
    // Predicated region
    $region38: #{autoencoder_forward.1} parent=1 // pred_check
      _
    $region39: #{autoencoder_forward.1} parent=1 // pred_check_branch
      %104 = sbr.rel (0) target = $region41
    $region40: #{autoencoder_forward.1} parent=1 // pred_region
      %105 = dma.done [#allocation3], 16
    $region41: #{autoencoder_forward.1} parent=1 // pred_fallthru
      _
    // Predicated region
    $region42: #{autoencoder_forward.1} parent=1 // pred_check
      _
    $region43: #{autoencoder_forward.1} parent=1 // pred_check_branch
      %107 = sbr.rel (0) target = $region45
    $region44: #{autoencoder_forward.1} parent=1 // pred_region
      %108 = dma.done [#allocation5], 16
    $region45: #{autoencoder_forward.1} parent=1 // pred_fallthru
      _
    // Predicated region
    $region46: #{autoencoder_forward.1} parent=1 // pred_check
      _
    $region47: #{autoencoder_forward.1} parent=1 // pred_check_branch
      %110 = sbr.rel (0) target = $region49
    $region48: #{autoencoder_forward.1} parent=1 // pred_region
      %111 = dma.done [#allocation5], 16
    $region49: #{autoencoder_forward.1} parent=1 // pred_fallthru
      _
    // Predicated region
    $region50: #{autoencoder_forward.1} parent=1 // pred_check
      _
    $region51: #{autoencoder_forward.1} parent=1 // pred_check_branch
      %113 = sbr.rel (0) target = $region53
    $region52: #{autoencoder_forward.1} parent=1 // pred_region
      %114 = dma.done [#allocation8], 16
    $region53: #{autoencoder_forward.1} parent=1 // pred_fallthru
      _
    // Predicated region
    $region54: #{autoencoder_forward.1} parent=1 // pred_check
      _
    $region55: #{autoencoder_forward.1} parent=1 // pred_check_branch
      %116 = sbr.rel (0) target = $region57
    $region56: #{autoencoder_forward.1} parent=1 // pred_region
      %117 = dma.done [#allocation8], 16
    $region57: #{autoencoder_forward.1} parent=1 // pred_fallthru
      _
    // Predicated region
    $region58: #{autoencoder_forward.1} parent=1 // pred_check
      _
    $region59: #{autoencoder_forward.1} parent=1 // pred_check_branch
      %119 = sbr.rel (0) target = $region61
    $region60: #{autoencoder_forward.1} parent=1 // pred_region
      %120 = dma.done [#allocation11], 16
    $region61: #{autoencoder_forward.1} parent=1 // pred_fallthru
      _
    // Predicated region
    $region62: #{autoencoder_forward.1} parent=1 // pred_check
      _
    $region63: #{autoencoder_forward.1} parent=1 // pred_check_branch
      %122 = sbr.rel (0) target = $region65
    $region64: #{autoencoder_forward.1} parent=1 // pred_region
      %123 = dma.done [#allocation11], 16
    $region65: #{autoencoder_forward.1} parent=1 // pred_fallthru
      _
    // Predicated region
    $region66: #{autoencoder_forward.1} parent=1 // pred_check
      _
    $region67: #{autoencoder_forward.1} parent=1 // pred_check_branch
      %125 = sbr.rel (0) target = $region69
    $region68: #{autoencoder_forward.1} parent=1 // pred_region
      %126 = dma.done [#allocation14], 16
    $region69: #{autoencoder_forward.1} parent=1 // pred_fallthru
      _
    %127 = sfence
    %s128 = sld [smem:[#allocation2]]
    %s129 = sld [smem:[#allocation2 + $0x1]]
    %s130 = sld [smem:[#allocation2 + $0x2]]
    %s131 = sld [smem:[#allocation2 + $0x3]]
    %s132 = sld [smem:[#allocation2 + $0x4]]
    %s133 = sld [smem:[#allocation2 + $0x5]]
    %s134 = sld [smem:[#allocation2 + $0x6]]
    %s135 = sld [smem:[#allocation2 + $0x7]]
    %s136 = sld [smem:[#allocation2 + $0x8]]
    %s137 = sld [smem:[#allocation2 + $0x9]]
    %s138 = sld [smem:[#allocation2 + $0xa]]
    %s139 = sld [smem:[#allocation2 + $0xb]]
    %s140 = sld [smem:[#allocation2 + $0xc]]
    %s141 = sld [smem:[#allocation2 + $0xd]]
    %s142 = sld [smem:[#allocation2 + $0xe]]
    %s143 = sld [smem:[#allocation2 + $0xf]]
    %s144 = sld [smem:[#allocation2 + $0x10]]
    %s145 = sld [smem:[#allocation2 + $0x11]]
    %s146 = sld [smem:[#allocation4]]
    %s147 = sld [smem:[#allocation4 + $0x1]]
    %s148 = sld [smem:[#allocation4 + $0x2]]
    %s149 = sld [smem:[#allocation4 + $0x3]]
    %s150 = sld [smem:[#allocation4 + $0x4]]
    %s151 = sld [smem:[#allocation4 + $0x5]]
    %s152 = sld [smem:[#allocation4 + $0x6]]
    %s153 = sld [smem:[#allocation4 + $0x7]]
    %s154 = sld [smem:[#allocation4 + $0x8]]
    %s155 = sld [smem:[#allocation6]]
    %s156 = sld [smem:[#allocation6 + $0x1]]
    %s157 = sld [smem:[#allocation6 + $0x2]]
    %s158 = sld [smem:[#allocation6 + $0x3]]
    %s159 = sld [smem:[#allocation6 + $0x4]]
    %s160 = sld [smem:[#allocation6 + $0x5]]
    %s161 = sld [smem:[#allocation6 + $0x6]]
    %s162 = sld [smem:[#allocation6 + $0x7]]
    %s163 = sld [smem:[#allocation6 + $0x8]]
    %s164 = sld [smem:[#allocation6 + $0x9]]
    %s165 = sld [smem:[#allocation6 + $0xa]]
    %s166 = sld [smem:[#allocation6 + $0xb]]
    %s167 = sld [smem:[#allocation6 + $0xc]]
    %s168 = sld [smem:[#allocation6 + $0xd]]
    %s169 = sld [smem:[#allocation6 + $0xe]]
    %s170 = sld [smem:[#allocation6 + $0xf]]
    %s171 = sld [smem:[#allocation6 + $0x10]]
    %s172 = sld [smem:[#allocation6 + $0x11]]
    %s173 = sld [smem:[#allocation7]]
    %s174 = sld [smem:[#allocation7 + $0x1]]
    %s175 = sld [smem:[#allocation9]]
    %s176 = sld [smem:[#allocation9 + $0x1]]
    %s177 = sld [smem:[#allocation9 + $0x2]]
    %s178 = sld [smem:[#allocation9 + $0x3]]
    %s179 = sld [smem:[#allocation9 + $0x4]]
    %s180 = sld [smem:[#allocation9 + $0x5]]
    %s181 = sld [smem:[#allocation9 + $0x6]]
    %s182 = sld [smem:[#allocation9 + $0x7]]
    %s183 = sld [smem:[#allocation9 + $0x8]]
    %s184 = sld [smem:[#allocation9 + $0x9]]
    %s185 = sld [smem:[#allocation9 + $0xa]]
    %s186 = sld [smem:[#allocation9 + $0xb]]
    %s187 = sld [smem:[#allocation9 + $0xc]]
    %s188 = sld [smem:[#allocation9 + $0xd]]
    %s189 = sld [smem:[#allocation9 + $0xe]]
    %s190 = sld [smem:[#allocation9 + $0xf]]
    %s191 = sld [smem:[#allocation9 + $0x10]]
    %s192 = sld [smem:[#allocation9 + $0x11]]
    %s193 = sld [smem:[#allocation10]]
    %s194 = sld [smem:[#allocation10 + $0x1]]
    %s195 = sld [smem:[#allocation10 + $0x2]]
    %s196 = sld [smem:[#allocation10 + $0x3]]
    %s197 = sld [smem:[#allocation10 + $0x4]]
    %s198 = sld [smem:[#allocation10 + $0x5]]
    %s199 = sld [smem:[#allocation10 + $0x6]]
    %s200 = sld [smem:[#allocation10 + $0x7]]
    %s201 = sld [smem:[#allocation10 + $0x8]]
    %s202 = sld [smem:[#allocation12]]
    %s203 = sld [smem:[#allocation12 + $0x1]]
    %s204 = sld [smem:[#allocation12 + $0x2]]
    %s205 = sld [smem:[#allocation12 + $0x3]]
    %s206 = sld [smem:[#allocation12 + $0x4]]
    %s207 = sld [smem:[#allocation12 + $0x5]]
    %s208 = sld [smem:[#allocation12 + $0x6]]
    %s209 = sld [smem:[#allocation12 + $0x7]]
    %s210 = sld [smem:[#allocation12 + $0x8]]
    %s211 = sld [smem:[#allocation12 + $0x9]]
    %s212 = sld [smem:[#allocation12 + $0xa]]
    %s213 = sld [smem:[#allocation12 + $0xb]]
    %s214 = sld [smem:[#allocation12 + $0xc]]
    %s215 = sld [smem:[#allocation12 + $0xd]]
    %s216 = sld [smem:[#allocation12 + $0xe]]
    %s217 = sld [smem:[#allocation12 + $0xf]]
    %s218 = sld [smem:[#allocation12 + $0x10]]
    %s219 = sld [smem:[#allocation12 + $0x11]]
    %s220 = sld [smem:[#allocation13]]
    %s221 = sld [smem:[#allocation13 + $0x1]]
    %v222 = vld [vmem:[%s0] sm:$0x1]
    %s223 = sadd.s32 0, 1
    %s224 = scalar_lea.vmem %s0, %s223
    %v225 = vld [vmem:[%s224] sm:$0x1]
    %v226 = vstv %s128
    %v227 = vmul.f32 %v222, %v226
    %v228 = vstv %s129
    %v229 = vmul.f32 %v225, %v228
    %v230 = vadd.f32 %v227, %v229
    %v231 = vstv %s146
    %v232 = vadd.f32 %v230, %v231
    %v233 = vmax.f32 %v232, 0.0
    %v234 = vstv %s130
    %v235 = vmul.f32 %v222, %v234
    %v236 = vstv %s131
    %v237 = vmul.f32 %v225, %v236
    %v238 = vadd.f32 %v235, %v237
    %v239 = vstv %s147
    %v240 = vadd.f32 %v238, %v239
    %v241 = vmax.f32 %v240, 0.0
    %v242 = vstv %s132
    %v243 = vmul.f32 %v222, %v242
    %v244 = vstv %s133
    %v245 = vmul.f32 %v225, %v244
    %v246 = vadd.f32 %v243, %v245
    %v247 = vstv %s148
    %v248 = vadd.f32 %v246, %v247
    %v249 = vmax.f32 %v248, 0.0
    %v250 = vstv %s134
    %v251 = vmul.f32 %v222, %v250
    %v252 = vstv %s135
    %v253 = vmul.f32 %v225, %v252
    %v254 = vadd.f32 %v251, %v253
    %v255 = vstv %s149
    %v256 = vadd.f32 %v254, %v255
    %v257 = vmax.f32 %v256, 0.0
    %v258 = vstv %s136
    %v259 = vmul.f32 %v222, %v258
    %v260 = vstv %s137
    %v261 = vmul.f32 %v225, %v260
    %v262 = vadd.f32 %v259, %v261
    %v263 = vstv %s150
    %v264 = vadd.f32 %v262, %v263
    %v265 = vmax.f32 %v264, 0.0
    %v266 = vstv %s138
    %v267 = vmul.f32 %v222, %v266
    %v268 = vstv %s139
    %v269 = vmul.f32 %v225, %v268
    %v270 = vadd.f32 %v267, %v269
    %v271 = vstv %s151
    %v272 = vadd.f32 %v270, %v271
    %v273 = vmax.f32 %v272, 0.0
    %v274 = vstv %s140
    %v275 = vmul.f32 %v222, %v274
    %v276 = vstv %s141
    %v277 = vmul.f32 %v225, %v276
    %v278 = vadd.f32 %v275, %v277
    %v279 = vstv %s152
    %v280 = vadd.f32 %v278, %v279
    %v281 = vmax.f32 %v280, 0.0
    %v282 = vstv %s142
    %v283 = vmul.f32 %v222, %v282
    %v284 = vstv %s143
    %v285 = vmul.f32 %v225, %v284
    %v286 = vadd.f32 %v283, %v285
    %v287 = vstv %s153
    %v288 = vadd.f32 %v286, %v287
    %v289 = vmax.f32 %v288, 0.0
    %v290 = vstv %s144
    %v291 = vmul.f32 %v222, %v290
    %v292 = vstv %s145
    %v293 = vmul.f32 %v225, %v292
    %v294 = vadd.f32 %v291, %v293
    %v295 = vstv %s154
    %v296 = vadd.f32 %v294, %v295
    %v297 = vmax.f32 %v296, 0.0
    %v298 = vstv %s155
    %v299 = vmul.f32 %v233, %v298
    %v300 = vstv %s156
    %v301 = vmul.f32 %v241, %v300
    %v302 = vadd.f32 %v299, %v301
    %v303 = vstv %s157
    %v304 = vmul.f32 %v249, %v303
    %v305 = vadd.f32 %v302, %v304
    %v306 = vstv %s158
    %v307 = vmul.f32 %v257, %v306
    %v308 = vadd.f32 %v305, %v307
    %v309 = vstv %s159
    %v310 = vmul.f32 %v265, %v309
    %v311 = vadd.f32 %v308, %v310
    %v312 = vstv %s160
    %v313 = vmul.f32 %v273, %v312
    %v314 = vadd.f32 %v311, %v313
    %v315 = vstv %s161
    %v316 = vmul.f32 %v281, %v315
    %v317 = vadd.f32 %v314, %v316
    %v318 = vstv %s162
    %v319 = vmul.f32 %v289, %v318
    %v320 = vadd.f32 %v317, %v319
    %v321 = vstv %s163
    %v322 = vmul.f32 %v297, %v321
    %v323 = vadd.f32 %v320, %v322
    %v324 = vstv %s173
    %v325 = vadd.f32 %v323, %v324
    %v326 = vstv %s164
    %v327 = vmul.f32 %v233, %v326
    %v328 = vstv %s165
    %v329 = vmul.f32 %v241, %v328
    %v330 = vadd.f32 %v327, %v329
    %v331 = vstv %s166
    %v332 = vmul.f32 %v249, %v331
    %v333 = vadd.f32 %v330, %v332
    %v334 = vstv %s167
    %v335 = vmul.f32 %v257, %v334
    %v336 = vadd.f32 %v333, %v335
    %v337 = vstv %s168
    %v338 = vmul.f32 %v265, %v337
    %v339 = vadd.f32 %v336, %v338
    %v340 = vstv %s169
    %v341 = vmul.f32 %v273, %v340
    %v342 = vadd.f32 %v339, %v341
    %v343 = vstv %s170
    %v344 = vmul.f32 %v281, %v343
    %v345 = vadd.f32 %v342, %v344
    %v346 = vstv %s171
    %v347 = vmul.f32 %v289, %v346
    %v348 = vadd.f32 %v345, %v347
    %v349 = vstv %s172
    %v350 = vmul.f32 %v297, %v349
    %v351 = vadd.f32 %v348, %v350
    %v352 = vstv %s174
    %v353 = vadd.f32 %v351, %v352
    %v354 = vmax.f32 %v325, %v353
    %v355 = vsub.f32 %v325, %v354
    %v356 = vmul.f32 %v355, 1.442695
    %v357 = vpow.pop %v356
    %v358 = vsub.f32 %v353, %v354
    %v359 = vmul.f32 %v358, 1.442695
    %v360 = vpow.pop %v359
    %v361 = vadd.f32 %v357, %v360
    %v362 = vrcp.pop %v361
    %v363 = vmul.f32 %v357, %v362
    %v364 = vmul.f32 %v360, %v362
    %v365 = vadd.f32 %v363, %v364
    %v366 = vrcp.pop %v365
    %v367 = vmul.f32 %v363, %v366
    %v368 = vmul.f32 %v364, %v366
    %369 = vst [vmem:[%s10] sm:$0x1] %v367
    %s370 = scalar_lea.vmem %s10, %s223
    %371 = vst [vmem:[%s370] sm:$0x1] %v368
    %v372 = vstv %s175
    %v373 = vmul.f32 %v367, %v372
    %v374 = vstv %s176
    %v375 = vmul.f32 %v368, %v374
    %v376 = vadd.f32 %v373, %v375
    %v377 = vstv %s193
    %v378 = vadd.f32 %v376, %v377
    %v379 = vmax.f32 %v378, 0.0
    %v380 = vstv %s177
    %v381 = vmul.f32 %v367, %v380
    %v382 = vstv %s178
    %v383 = vmul.f32 %v368, %v382
    %v384 = vadd.f32 %v381, %v383
    %v385 = vstv %s194
    %v386 = vadd.f32 %v384, %v385
    %v387 = vmax.f32 %v386, 0.0
    %v388 = vstv %s179
    %v389 = vmul.f32 %v367, %v388
    %v390 = vstv %s180
    %v391 = vmul.f32 %v368, %v390
    %v392 = vadd.f32 %v389, %v391
    %v393 = vstv %s195
    %v394 = vadd.f32 %v392, %v393
    %v395 = vmax.f32 %v394, 0.0
    %v396 = vstv %s181
    %v397 = vmul.f32 %v367, %v396
    %v398 = vstv %s182
    %v399 = vmul.f32 %v368, %v398
    %v400 = vadd.f32 %v397, %v399
    %v401 = vstv %s196
    %v402 = vadd.f32 %v400, %v401
    %v403 = vmax.f32 %v402, 0.0
    %v404 = vstv %s183
    %v405 = vmul.f32 %v367, %v404
    %v406 = vstv %s184
    %v407 = vmul.f32 %v368, %v406
    %v408 = vadd.f32 %v405, %v407
    %v409 = vstv %s197
    %v410 = vadd.f32 %v408, %v409
    %v411 = vmax.f32 %v410, 0.0
    %v412 = vstv %s185
    %v413 = vmul.f32 %v367, %v412
    %v414 = vstv %s186
    %v415 = vmul.f32 %v368, %v414
    %v416 = vadd.f32 %v413, %v415
    %v417 = vstv %s198
    %v418 = vadd.f32 %v416, %v417
    %v419 = vmax.f32 %v418, 0.0
    %v420 = vstv %s187
    %v421 = vmul.f32 %v367, %v420
    %v422 = vstv %s188
    %v423 = vmul.f32 %v368, %v422
    %v424 = vadd.f32 %v421, %v423
    %v425 = vstv %s199
    %v426 = vadd.f32 %v424, %v425
    %v427 = vmax.f32 %v426, 0.0
    %v428 = vstv %s189
    %v429 = vmul.f32 %v367, %v428
    %v430 = vstv %s190
    %v431 = vmul.f32 %v368, %v430
    %v432 = vadd.f32 %v429, %v431
    %v433 = vstv %s200
    %v434 = vadd.f32 %v432, %v433
    %v435 = vmax.f32 %v434, 0.0
    %v436 = vstv %s191
    %v437 = vmul.f32 %v367, %v436
    %v438 = vstv %s192
    %v439 = vmul.f32 %v368, %v438
    %v440 = vadd.f32 %v437, %v439
    %v441 = vstv %s201
    %v442 = vadd.f32 %v440, %v441
    %v443 = vmax.f32 %v442, 0.0
    %v444 = vstv %s202
    %v445 = vmul.f32 %v379, %v444
    %v446 = vstv %s203
    %v447 = vmul.f32 %v387, %v446
    %v448 = vadd.f32 %v445, %v447
    %v449 = vstv %s204
    %v450 = vmul.f32 %v395, %v449
    %v451 = vadd.f32 %v448, %v450
    %v452 = vstv %s205
    %v453 = vmul.f32 %v403, %v452
    %v454 = vadd.f32 %v451, %v453
    %v455 = vstv %s206
    %v456 = vmul.f32 %v411, %v455
    %v457 = vadd.f32 %v454, %v456
    %v458 = vstv %s207
    %v459 = vmul.f32 %v419, %v458
    %v460 = vadd.f32 %v457, %v459
    %v461 = vstv %s208
    %v462 = vmul.f32 %v427, %v461
    %v463 = vadd.f32 %v460, %v462
    %v464 = vstv %s209
    %v465 = vmul.f32 %v435, %v464
    %v466 = vadd.f32 %v463, %v465
    %v467 = vstv %s210
    %v468 = vmul.f32 %v443, %v467
    %v469 = vadd.f32 %v466, %v468
    %v470 = vstv %s220
    %v471 = vadd.f32 %v469, %v470
    %v472 = vstv %s211
    %v473 = vmul.f32 %v379, %v472
    %v474 = vstv %s212
    %v475 = vmul.f32 %v387, %v474
    %v476 = vadd.f32 %v473, %v475
    %v477 = vstv %s213
    %v478 = vmul.f32 %v395, %v477
    %v479 = vadd.f32 %v476, %v478
    %v480 = vstv %s214
    %v481 = vmul.f32 %v403, %v480
    %v482 = vadd.f32 %v479, %v481
    %v483 = vstv %s215
    %v484 = vmul.f32 %v411, %v483
    %v485 = vadd.f32 %v482, %v484
    %v486 = vstv %s216
    %v487 = vmul.f32 %v419, %v486
    %v488 = vadd.f32 %v485, %v487
    %v489 = vstv %s217
    %v490 = vmul.f32 %v427, %v489
    %v491 = vadd.f32 %v488, %v490
    %v492 = vstv %s218
    %v493 = vmul.f32 %v435, %v492
    %v494 = vadd.f32 %v491, %v493
    %v495 = vstv %s219
    %v496 = vmul.f32 %v443, %v495
    %v497 = vadd.f32 %v494, %v496
    %v498 = vstv %s221
    %v499 = vadd.f32 %v497, %v498
    %v500 = vmax.f32 %v471, %v499
    %v501 = vsub.f32 %v471, %v500
    %v502 = vmul.f32 %v501, 1.442695
    %v503 = vpow.pop %v502
    %v504 = vsub.f32 %v499, %v500
    %v505 = vmul.f32 %v504, 1.442695
    %v506 = vpow.pop %v505
    %v507 = vadd.f32 %v503, %v506
    %v508 = vrcp.pop %v507
    %v509 = vmul.f32 %v503, %v508
    %v510 = vmul.f32 %v506, %v508
    %511 = vst [vmem:[%s9] sm:$0x1] %v509
    %s512 = scalar_lea.vmem %s9, %s223
    %513 = vst [vmem:[%s512] sm:$0x1] %v510
    // Predicated region
    $region70: #{autoencoder_forward.1} parent=1 // pred_check
      _
    $region71: #{autoencoder_forward.1} parent=1 // pred_check_branch
      %515 = sbr.rel (0) target = $region73
    $region72: #{autoencoder_forward.1} parent=1 // pred_region
      _
    $region73: #{autoencoder_forward.1} parent=1 // pred_fallthru
      _
    // Predicated region
    $region74: #{autoencoder_forward.1} parent=1 // pred_check
      _
    $region75: #{autoencoder_forward.1} parent=1 // pred_check_branch
      %517 = sbr.rel (0) target = $region77
    $region76: #{autoencoder_forward.1} parent=1 // pred_region
      _
    $region77: #{autoencoder_forward.1} parent=1 // pred_fallthru
      _
    // Predicated region
    $region78: #{autoencoder_forward.1} parent=1 // pred_check
      _
    $region79: #{autoencoder_forward.1} parent=1 // pred_check_branch
      %519 = sbr.rel (0) target = $region81
    $region80: #{autoencoder_forward.1} parent=1 // pred_region
      _
    $region81: #{autoencoder_forward.1} parent=1 // pred_fallthru
      _
    // Predicated region
    $region82: #{autoencoder_forward.1} parent=1 // pred_check
      _
    $region83: #{autoencoder_forward.1} parent=1 // pred_check_branch
      %521 = sbr.rel (0) target = $region85
    $region84: #{autoencoder_forward.1} parent=1 // pred_region
      _
    $region85: #{autoencoder_forward.1} parent=1 // pred_fallthru
      _
    %522 = vsyncpa [#allocation3], 1
    %523 = vsyncpa [#allocation5], 1
    %524 = vsyncpa [#allocation8], 1
    %525 = vsyncpa [#allocation11], 1
    %526 = vsyncpa [#allocation14], 1

</llo_original>
